<compile_context>
chip_gen: v6e
topology: v6e:2x2x1
jax: 0.10.0
libtpu: 0.0.40
codegen_flags: <defaults>
</compile_context>

<pallas_src>
import jax
import jax.numpy as jnp
from jax.experimental import pallas as pl
from jax.experimental.pallas import tpu as pltpu

IN_F = 32 * 4 * 4   # 512
HID = 512
OUT_F = 8
TM_MAX = 2048       # largest batch tile (multiple of 256)


def mlp_kernel(x_ref, w1_ref, b1_ref, w2_ref, b2_ref, o_ref):
    # fc1: bf16 operands on the MXU, f32 accumulation. x arrives already bf16.
    h = jnp.dot(x_ref[...], w1_ref[...], preferred_element_type=jnp.float32)
    # bias + ReLU in f32 on the VPU (b1 is (1, HID), broadcasts over the batch tile).
    h = jnp.maximum(h + b1_ref[...], 0.0)
    # TODO(synk): nn.Dropout(0.5) is identity in eval mode; train-mode dropout would use
    # pltpu.prng_seed + pltpu.prng_random_bits to build the keep-mask.
    # fc2: narrow (512 -> 8) matmul; result written straight to the (TM, 8) output block.
    o = jnp.dot(h.astype(jnp.bfloat16), w2_ref[...], preferred_element_type=jnp.float32)
    o_ref[...] = (o + b2_ref[...]).astype(o_ref.dtype)


def _choose_tm(B):
    """Batch-tile size: small B -> one tile rounded to a multiple of 16 (bf16 sublane packing);
    larger B -> multiples of 256, arranged so the grid has >= 2 steps (v7x has 2 TensorCores
    sharing the 'parallel' batch axis), capped at TM_MAX."""
    if B <= 256:
        return max(16, ((B + 15) // 16) * 16)
    half = (B + 1) // 2                       # ceil(B / 2) -> at least 2 grid steps
    tm = ((half + 255) // 256) * 256
    return min(TM_MAX, tm)


def mlp_forward(x, w1, b1, w2, b2):
    """x: [B, IN_F] bfloat16 (preferred; f32 accepted as fallback).
    w1: [IN_F, HID] bf16, b1: [1, HID] f32, w2: [HID, OUT_F] bf16, b2: [1, OUT_F] f32.
    Returns [B, OUT_F] float32."""
    if x.dtype != jnp.bfloat16:
        # Fallback only — the intended producer feeds bf16 so no extra XLA cast pass is emitted.
        x = x.astype(jnp.bfloat16)
    B = x.shape[0]
    TM = _choose_tm(B)
    grid = (pl.cdiv(B, TM),)

    cost = pl.CostEstimate(
        flops=2 * B * IN_F * HID + 2 * B * HID * OUT_F,
        transcendentals=0,
        bytes_accessed=(B * IN_F * 2            # x (bf16)
                        + IN_F * HID * 2        # w1 (bf16)
                        + HID * 4               # b1 (f32)
                        + HID * OUT_F * 2       # w2 (bf16)
                        + OUT_F * 4             # b2 (f32)
                        + B * OUT_F * 4),       # out (f32)
    )

    resident = dict(pipeline_mode=pl.Buffered(1))  # constant index_map -> single buffer

    return pl.pallas_call(
        mlp_kernel,
        out_shape=jax.ShapeDtypeStruct((B, OUT_F), jnp.float32),
        grid=grid,
        in_specs=[
            pl.BlockSpec((TM, IN_F), lambda i: (i, 0)),                 # x: tiled over batch
            pl.BlockSpec((IN_F, HID), lambda i: (0, 0), **resident),    # w1: resident in VMEM
            pl.BlockSpec((1, HID), lambda i: (0, 0), **resident),       # b1: resident
            pl.BlockSpec((HID, OUT_F), lambda i: (0, 0), **resident),   # w2: resident
            pl.BlockSpec((1, OUT_F), lambda i: (0, 0), **resident),     # b2: resident
        ],
        out_specs=pl.BlockSpec((TM, OUT_F), lambda i: (i, 0)),
        compiler_params=pltpu.CompilerParams(
            dimension_semantics=("parallel",),       # v7x: 2 TCs share the batch axis
            vmem_limit_bytes=32 * 1024 * 1024,       # safe headroom for TM up to 2048 on all chips
        ),
        cost_estimate=cost,
    )(x, w1, b1, w2, b2)


def init_params(key):
    """f32 init mimicking nn.Linear's uniform(-1/sqrt(fan_in), 1/sqrt(fan_in)).
    Weights are returned already transposed to [in, out]."""
    k1, k2, k3, k4 = jax.random.split(key, 4)
    bound1 = 1.0 / jnp.sqrt(jnp.float32(IN_F))
    bound2 = 1.0 / jnp.sqrt(jnp.float32(HID))
    w1 = jax.random.uniform(k1, (IN_F, HID), jnp.float32, -bound1, bound1)
    b1 = jax.random.uniform(k2, (1, HID), jnp.float32, -bound1, bound1)
    w2 = jax.random.uniform(k3, (HID, OUT_F), jnp.float32, -bound2, bound2)
    b2 = jax.random.uniform(k4, (1, OUT_F), jnp.float32, -bound2, bound2)
    return w1, b1, w2, b2


def pack_params(w1, b1, w2, b2):
    """One-time packing: bf16 weight storage (halves weight HBM traffic); biases stay f32."""
    return w1.astype(jnp.bfloat16), b1, w2.astype(jnp.bfloat16), b2


def mlp_ref(x_bf16, w1, b1, w2, b2):
    """Pure-JAX reference with the same mixed precision (bf16 operands, f32 accumulate)."""
    h = jnp.dot(x_bf16, w1, preferred_element_type=jnp.float32) + b1
    h = jnp.maximum(h, 0.0)
    return jnp.dot(h.astype(jnp.bfloat16), w2, preferred_element_type=jnp.float32) + b2


if __name__ == "__main__":
    key = jax.random.PRNGKey(0)
    kx, kp = jax.random.split(key)
    w1, b1, w2, b2 = init_params(kp)
    w1p, b1p, w2p, b2p = pack_params(w1, b1, w2, b2)

    # Small-batch check (B=2): single grid step, partial (masked) tile.
    B = 2
    x = jax.random.normal(kx, (B, IN_F), jnp.float32).astype(jnp.bfloat16)  # producer-side bf16
    out = jax.block_until_ready(mlp_forward(x, w1p, b1p, w2p, b2p))
    ref = mlp_ref(x, w1p, b1p, w2p, b2p)
    assert out.shape == (B, OUT_F), out.shape
    assert jnp.allclose(out, ref, atol=1e-3, rtol=1e-3), float(jnp.max(jnp.abs(out - ref)))

    # Multi-tile check (B=300): grid of 2 steps, masked partial last tile (44 rows).
    B2 = 300
    x2 = jax.random.normal(kx, (B2, IN_F), jnp.float32).astype(jnp.bfloat16)
    out2 = jax.block_until_ready(mlp_forward(x2, w1p, b1p, w2p, b2p))
    ref2 = mlp_ref(x2, w1p, b1p, w2p, b2p)
    assert out2.shape == (B2, OUT_F), out2.shape
    assert jnp.allclose(out2, ref2, atol=1e-3, rtol=1e-3), float(jnp.max(jnp.abs(out2 - ref2)))

    print("KERNEL_OK")
</pallas_src>

<mosaic_0001>
module attributes {stable_mosaic.version = 11 : i64} {
  func.func @mlp_kernel(%arg0: i32, %arg1: memref<16x512xbf16, #tpu.memory_space<vmem>>, %arg2: memref<512x512xbf16, #tpu.memory_space<vmem>>, %arg3: memref<1x512xf32, #tpu.memory_space<vmem>>, %arg4: memref<512x8xbf16, #tpu.memory_space<vmem>>, %arg5: memref<1x8xf32, #tpu.memory_space<vmem>>, %arg6: memref<16x8xf32, #tpu.memory_space<vmem>>) attributes {dimension_semantics = [#tpu.dimension_semantics<parallel>], iteration_bounds = array<i64: 1>, scalar_prefetch = 0 : i64, scratch_operands = 0 : i64, tpu.core_type = #tpu.core_type<tc>, window_params = [{transform_indices = @transform_0, window_bounds = array<i64: 16, 512>}, {pipeline_mode = #tpu.pipeline_mode<synchronous>, transform_indices = @transform_1, window_bounds = array<i64: 512, 512>}, {pipeline_mode = #tpu.pipeline_mode<synchronous>, transform_indices = @transform_2, window_bounds = array<i64: 1, 512>}, {pipeline_mode = #tpu.pipeline_mode<synchronous>, transform_indices = @transform_3, window_bounds = array<i64: 512, 8>}, {pipeline_mode = #tpu.pipeline_mode<synchronous>, transform_indices = @transform_4, window_bounds = array<i64: 1, 8>}, {transform_indices = @transform_5, window_bounds = array<i64: 16, 8>}]} {
    %c0 = arith.constant 0 : index
    %c0_0 = arith.constant 0 : index
    %0 = vector.load %arg1[%c0, %c0_0] : memref<16x512xbf16, #tpu.memory_space<vmem>>, vector<16x512xbf16>
    %c0_1 = arith.constant 0 : index
    %c0_2 = arith.constant 0 : index
    %1 = vector.load %arg2[%c0_1, %c0_2] : memref<512x512xbf16, #tpu.memory_space<vmem>>, vector<512x512xbf16>
    %cst = arith.constant dense<0.000000e+00> : vector<16x512xf32>
    %2 = tpu.matmul %0, %1, %cst {dimension_numbers = #tpu.dot_dimension_numbers<[1], [0], [0], [1], [0, 0, 1, 1], [], []>} : vector<16x512xbf16>, vector<512x512xbf16>, vector<16x512xf32> -> vector<16x512xf32>
    %c0_3 = arith.constant 0 : index
    %c0_4 = arith.constant 0 : index
    %3 = vector.load %arg3[%c0_3, %c0_4] : memref<1x512xf32, #tpu.memory_space<vmem>>, vector<1x512xf32>
    %4 = vector.broadcast %3 : vector<1x512xf32> to vector<16x512xf32>
    %5 = arith.addf %2, %4 : vector<16x512xf32>
    %cst_5 = arith.constant 0.000000e+00 : f32
    %6 = vector.broadcast %cst_5 : f32 to vector<16x512xf32>
    %7 = arith.maximumf %5, %6 : vector<16x512xf32>
    %8 = arith.truncf %7 : vector<16x512xf32> to vector<16x512xbf16>
    %c0_6 = arith.constant 0 : index
    %c0_7 = arith.constant 0 : index
    %9 = vector.load %arg4[%c0_6, %c0_7] : memref<512x8xbf16, #tpu.memory_space<vmem>>, vector<512x8xbf16>
    %cst_8 = arith.constant dense<0.000000e+00> : vector<16x8xf32>
    %10 = tpu.matmul %8, %9, %cst_8 {dimension_numbers = #tpu.dot_dimension_numbers<[1], [0], [0], [1], [0, 0, 1, 1], [], []>} : vector<16x512xbf16>, vector<512x8xbf16>, vector<16x8xf32> -> vector<16x8xf32>
    %c0_9 = arith.constant 0 : index
    %c0_10 = arith.constant 0 : index
    %11 = vector.load %arg5[%c0_9, %c0_10] : memref<1x8xf32, #tpu.memory_space<vmem>>, vector<1x8xf32>
    %12 = vector.broadcast %11 : vector<1x8xf32> to vector<16x8xf32>
    %13 = arith.addf %10, %12 : vector<16x8xf32>
    %c0_11 = arith.constant 0 : index
    %c0_12 = arith.constant 0 : index
    %14 = vector.load %arg6[%c0_11, %c0_12] : memref<16x8xf32, #tpu.memory_space<vmem>>, vector<16x8xf32>
    tpu.vector_store %arg6[%c0_11, %c0_12], %13 {strides = array<i32>} : memref<16x8xf32, #tpu.memory_space<vmem>>, vector<16x8xf32>,
    return
  }
  func.func @transform_0(%arg0: i32) -> (i32, i32) {
    %c0_i32 = arith.constant 0 : i32
    %c0_i32_0 = arith.constant 0 : i32
    return %arg0, %c0_i32 : i32, i32
  }
  func.func @transform_1(%arg0: i32) -> (i32, i32) {
    %c0_i32 = arith.constant 0 : i32
    %c0_i32_0 = arith.constant 0 : i32
    %c0_i32_1 = arith.constant 0 : i32
    return %c0_i32, %c0_i32_0 : i32, i32
  }
  func.func @transform_2(%arg0: i32) -> (i32, i32) {
    %c0_i32 = arith.constant 0 : i32
    %c0_i32_0 = arith.constant 0 : i32
    %c0_i32_1 = arith.constant 0 : i32
    return %c0_i32, %c0_i32_0 : i32, i32
  }
  func.func @transform_3(%arg0: i32) -> (i32, i32) {
    %c0_i32 = arith.constant 0 : i32
    %c0_i32_0 = arith.constant 0 : i32
    %c0_i32_1 = arith.constant 0 : i32
    return %c0_i32, %c0_i32_0 : i32, i32
  }
  func.func @transform_4(%arg0: i32) -> (i32, i32) {
    %c0_i32 = arith.constant 0 : i32
    %c0_i32_0 = arith.constant 0 : i32
    %c0_i32_1 = arith.constant 0 : i32
    return %c0_i32, %c0_i32_0 : i32, i32
  }
  func.func @transform_5(%arg0: i32) -> (i32, i32) {
    %c0_i32 = arith.constant 0 : i32
    %c0_i32_0 = arith.constant 0 : i32
    return %arg0, %c0_i32 : i32, i32
  }
}

</mosaic_0001>

<llo_original>
// kernel: tpu_custom_call.1
$region0: #{tpu_custom_call.1}
  #allocation0 [shape = 'u32[]', space=smem, size = 0x4, offset = 0x4, fixed_abs, tag = 'smem constant byte address 0x4 - core index']
  #allocation1 [shape = 'u32[144,128]{1,0:T(1,128)}', space=vmem, size = 0x12000, scoped, tag = 'internal scratch']
  %s0 = inlined_call_operand.vmem [shape: bf16[2,512], index: 0, kind: input, shape index: {}]
  %s1 = inlined_call_operand.hbm [shape: bf16[512,512], index: 1, kind: input, shape index: {}]
  %s2 = inlined_call_operand.vmem [shape: f32[1,512], index: 2, kind: input, shape index: {}]
  %s3 = inlined_call_operand.vmem [shape: bf16[512,8], index: 3, kind: input, shape index: {}]
  %s4 = inlined_call_operand.vmem [shape: f32[1,8], index: 4, kind: input, shape index: {}]
  %s5 = inlined_call_operand.hbm [shape: f32[2,8], index: 5, kind: output, shape index: {}]
  %s6 = sld [smem:[#allocation0]]
  $region34: #{tpu_custom_call.1} parent=0
    _
  %s8 = ssub.s32 1, %s6
  %s9 = scalar_select 0, %s8, %s6
  $region1: #{tpu_custom_call.1} parent=0
    #allocation2 [shape = 'u8[524288]{0}', space=vmem, size = 0x80000, scoped, tag = 'input window, operand 1, single buffered']
    #allocation3 [shape = 's32[1]{0}', space=sflag, size = 0x4, scoped, tag = 'scoped memory for tpu_custom_call.1']
    #allocation4 [shape = 's32[1]{0}', space=sflag, size = 0x4, scoped, tag = 'scoped memory for tpu_custom_call.1']
    #allocation5 [shape = 'u8[8192]{0}', space=vmem, size = 0x2000, scoped, tag = 'output window, operand 0, single buffered']
    %10 = vsyncpa [#allocation3], 0
    %11 = vsyncpa [#allocation4], 0
    // Predicated region
    $region2: #{tpu_custom_call.1} parent=1 // pred_check
      _
    $region3: #{tpu_custom_call.1} parent=1 // pred_check_branch
      %13 = sbr.rel (0) target = $region5
    $region4: #{tpu_custom_call.1} parent=1 // pred_region
      _
    $region5: #{tpu_custom_call.1} parent=1 // pred_fallthru
      _
    // Predicated region
    $region6: #{tpu_custom_call.1} parent=1 // pred_check
      _
    $region7: #{tpu_custom_call.1} parent=1 // pred_check_branch
      %15 = sbr.rel (0) target = $region9
    $region8: #{tpu_custom_call.1} parent=1 // pred_region
      %s17 = ssub.s32 16384, 16384
      %18 = vsyncadd [#allocation3], %s17
      %s19 = sshll.u32 [#allocation2], 4
      %s20 = int_to_ptr.vmem [resolvable:$true] %s19
      %25 = dma.hbm_to_vmem [thread:$0]  %s1, 16384, %s20, [#allocation3], 256, 256, 16
    $region9: #{tpu_custom_call.1} parent=1 // pred_fallthru
      _
    // Predicated region
    $region10: #{tpu_custom_call.1} parent=1 // pred_check
      _
    $region11: #{tpu_custom_call.1} parent=1 // pred_check_branch
      %27 = sbr.rel (0) target = $region13
    $region12: #{tpu_custom_call.1} parent=1 // pred_region
      _
    $region13: #{tpu_custom_call.1} parent=1 // pred_fallthru
      _
    // Predicated region
    $region14: #{tpu_custom_call.1} parent=1 // pred_check
      _
    $region15: #{tpu_custom_call.1} parent=1 // pred_check_branch
      %29 = sbr.rel (0) target = $region17
    $region16: #{tpu_custom_call.1} parent=1 // pred_region
      _
    $region17: #{tpu_custom_call.1} parent=1 // pred_fallthru
      _
    // Predicated region
    $region18: #{tpu_custom_call.1} parent=1 // pred_check
      _
    $region19: #{tpu_custom_call.1} parent=1 // pred_check_branch
      %31 = sbr.rel (0) target = $region21
    $region20: #{tpu_custom_call.1} parent=1 // pred_region
      _
    $region21: #{tpu_custom_call.1} parent=1 // pred_fallthru
      _
    // Predicated region
    $region22: #{tpu_custom_call.1} parent=1 // pred_check
      _
    $region23: #{tpu_custom_call.1} parent=1 // pred_check_branch
      %33 = sbr.rel (0) target = $region25
    $region24: #{tpu_custom_call.1} parent=1 // pred_region
      %34 = dma.done [#allocation3], 16384
    $region25: #{tpu_custom_call.1} parent=1 // pred_fallthru
      _
    %v36 = vld [vmem:[%s0] sm:$0xf]
    %v37 = vld [vmem:[%s0 + $0x4] sm:$0xf]
    %v38 = vld [vmem:[%s0 + $0x8] sm:$0xf]
    %v39 = vld [vmem:[%s0 + $0xc] sm:$0xf]
    %v40 = vld [vmem:[%s0 + $0x10] sm:$0xf]
    %v41 = vld [vmem:[%s0 + $0x14] sm:$0xf]
    %v42 = vld [vmem:[%s0 + $0x18] sm:$0xf]
    %v43 = vld [vmem:[%s0 + $0x1c] sm:$0xf]
    %v44 = vld [vmem:[#allocation2] sm:$0xff]
    %v45 = vld [vmem:[#allocation2 + $0x8] sm:$0xff]
    %v46 = vld [vmem:[#allocation2 + $0x10] sm:$0xff]
    %v47 = vld [vmem:[#allocation2 + $0x18] sm:$0xff]
    %v48 = vld [vmem:[#allocation2 + $0x20] sm:$0xff]
    %v49 = vld [vmem:[#allocation2 + $0x28] sm:$0xff]
    %v50 = vld [vmem:[#allocation2 + $0x30] sm:$0xff]
    %v51 = vld [vmem:[#allocation2 + $0x38] sm:$0xff]
    %v52 = vld [vmem:[#allocation2 + $0x40] sm:$0xff]
    %v53 = vld [vmem:[#allocation2 + $0x48] sm:$0xff]
    %v54 = vld [vmem:[#allocation2 + $0x50] sm:$0xff]
    %v55 = vld [vmem:[#allocation2 + $0x58] sm:$0xff]
    %v56 = vld [vmem:[#allocation2 + $0x60] sm:$0xff]
    %v57 = vld [vmem:[#allocation2 + $0x68] sm:$0xff]
    %v58 = vld [vmem:[#allocation2 + $0x70] sm:$0xff]
    %v59 = vld [vmem:[#allocation2 + $0x78] sm:$0xff]
    %v60 = vld [vmem:[#allocation2 + $0x80] sm:$0xff]
    %v61 = vld [vmem:[#allocation2 + $0x88] sm:$0xff]
    %v62 = vld [vmem:[#allocation2 + $0x90] sm:$0xff]
    %v63 = vld [vmem:[#allocation2 + $0x98] sm:$0xff]
    %v64 = vld [vmem:[#allocation2 + $0xa0] sm:$0xff]
    %v65 = vld [vmem:[#allocation2 + $0xa8] sm:$0xff]
    %v66 = vld [vmem:[#allocation2 + $0xb0] sm:$0xff]
    %v67 = vld [vmem:[#allocation2 + $0xb8] sm:$0xff]
    %v68 = vld [vmem:[#allocation2 + $0xc0] sm:$0xff]
    %v69 = vld [vmem:[#allocation2 + $0xc8] sm:$0xff]
    %v70 = vld [vmem:[#allocation2 + $0xd0] sm:$0xff]
    %v71 = vld [vmem:[#allocation2 + $0xd8] sm:$0xff]
    %v72 = vld [vmem:[#allocation2 + $0xe0] sm:$0xff]
    %v73 = vld [vmem:[#allocation2 + $0xe8] sm:$0xff]
    %v74 = vld [vmem:[#allocation2 + $0xf0] sm:$0xff]
    %v75 = vld [vmem:[#allocation2 + $0xf8] sm:$0xff]
    %v76 = vld [vmem:[#allocation2 + $0x100] sm:$0xff]
    %v77 = vld [vmem:[#allocation2 + $0x108] sm:$0xff]
    %v78 = vld [vmem:[#allocation2 + $0x110] sm:$0xff]
    %v79 = vld [vmem:[#allocation2 + $0x118] sm:$0xff]
    %v80 = vld [vmem:[#allocation2 + $0x120] sm:$0xff]
    %v81 = vld [vmem:[#allocation2 + $0x128] sm:$0xff]
    %v82 = vld [vmem:[#allocation2 + $0x130] sm:$0xff]
    %v83 = vld [vmem:[#allocation2 + $0x138] sm:$0xff]
    %v84 = vld [vmem:[#allocation2 + $0x140] sm:$0xff]
    %v85 = vld [vmem:[#allocation2 + $0x148] sm:$0xff]
    %v86 = vld [vmem:[#allocation2 + $0x150] sm:$0xff]
    %v87 = vld [vmem:[#allocation2 + $0x158] sm:$0xff]
    %v88 = vld [vmem:[#allocation2 + $0x160] sm:$0xff]
    %v89 = vld [vmem:[#allocation2 + $0x168] sm:$0xff]
    %v90 = vld [vmem:[#allocation2 + $0x170] sm:$0xff]
    %v91 = vld [vmem:[#allocation2 + $0x178] sm:$0xff]
    %v92 = vld [vmem:[#allocation2 + $0x180] sm:$0xff]
    %v93 = vld [vmem:[#allocation2 + $0x188] sm:$0xff]
    %v94 = vld [vmem:[#allocation2 + $0x190] sm:$0xff]
    %v95 = vld [vmem:[#allocation2 + $0x198] sm:$0xff]
    %v96 = vld [vmem:[#allocation2 + $0x1a0] sm:$0xff]
    %v97 = vld [vmem:[#allocation2 + $0x1a8] sm:$0xff]
    %v98 = vld [vmem:[#allocation2 + $0x1b0] sm:$0xff]
    %v99 = vld [vmem:[#allocation2 + $0x1b8] sm:$0xff]
    %v100 = vld [vmem:[#allocation2 + $0x1c0] sm:$0xff]
    %v101 = vld [vmem:[#allocation2 + $0x1c8] sm:$0xff]
    %v102 = vld [vmem:[#allocation2 + $0x1d0] sm:$0xff]
    %v103 = vld [vmem:[#allocation2 + $0x1d8] sm:$0xff]
    %v104 = vld [vmem:[#allocation2 + $0x1e0] sm:$0xff]
    %v105 = vld [vmem:[#allocation2 + $0x1e8] sm:$0xff]
    %v106 = vld [vmem:[#allocation2 + $0x1f0] sm:$0xff]
    %v107 = vld [vmem:[#allocation2 + $0x1f8] sm:$0xff]
    %v108 = vld [vmem:[#allocation2 + $0x200] sm:$0xff]
    %v109 = vld [vmem:[#allocation2 + $0x208] sm:$0xff]
    %v110 = vld [vmem:[#allocation2 + $0x210] sm:$0xff]
    %v111 = vld [vmem:[#allocation2 + $0x218] sm:$0xff]
    %v112 = vld [vmem:[#allocation2 + $0x220] sm:$0xff]
    %v113 = vld [vmem:[#allocation2 + $0x228] sm:$0xff]
    %v114 = vld [vmem:[#allocation2 + $0x230] sm:$0xff]
    %v115 = vld [vmem:[#allocation2 + $0x238] sm:$0xff]
    %v116 = vld [vmem:[#allocation2 + $0x240] sm:$0xff]
    %v117 = vld [vmem:[#allocation2 + $0x248] sm:$0xff]
    %v118 = vld [vmem:[#allocation2 + $0x250] sm:$0xff]
    %v119 = vld [vmem:[#allocation2 + $0x258] sm:$0xff]
    %v120 = vld [vmem:[#allocation2 + $0x260] sm:$0xff]
    %v121 = vld [vmem:[#allocation2 + $0x268] sm:$0xff]
    %v122 = vld [vmem:[#allocation2 + $0x270] sm:$0xff]
    %v123 = vld [vmem:[#allocation2 + $0x278] sm:$0xff]
    %v124 = vld [vmem:[#allocation2 + $0x280] sm:$0xff]
    %v125 = vld [vmem:[#allocation2 + $0x288] sm:$0xff]
    %v126 = vld [vmem:[#allocation2 + $0x290] sm:$0xff]
    %v127 = vld [vmem:[#allocation2 + $0x298] sm:$0xff]
    %v128 = vld [vmem:[#allocation2 + $0x2a0] sm:$0xff]
    %v129 = vld [vmem:[#allocation2 + $0x2a8] sm:$0xff]
    %v130 = vld [vmem:[#allocation2 + $0x2b0] sm:$0xff]
    %v131 = vld [vmem:[#allocation2 + $0x2b8] sm:$0xff]
    %v132 = vld [vmem:[#allocation2 + $0x2c0] sm:$0xff]
    %v133 = vld [vmem:[#allocation2 + $0x2c8] sm:$0xff]
    %v134 = vld [vmem:[#allocation2 + $0x2d0] sm:$0xff]
    %v135 = vld [vmem:[#allocation2 + $0x2d8] sm:$0xff]
    %v136 = vld [vmem:[#allocation2 + $0x2e0] sm:$0xff]
    %v137 = vld [vmem:[#allocation2 + $0x2e8] sm:$0xff]
    %v138 = vld [vmem:[#allocation2 + $0x2f0] sm:$0xff]
    %v139 = vld [vmem:[#allocation2 + $0x2f8] sm:$0xff]
    %v140 = vld [vmem:[#allocation2 + $0x300] sm:$0xff]
    %v141 = vld [vmem:[#allocation2 + $0x308] sm:$0xff]
    %v142 = vld [vmem:[#allocation2 + $0x310] sm:$0xff]
    %v143 = vld [vmem:[#allocation2 + $0x318] sm:$0xff]
    %v144 = vld [vmem:[#allocation2 + $0x320] sm:$0xff]
    %v145 = vld [vmem:[#allocation2 + $0x328] sm:$0xff]
    %v146 = vld [vmem:[#allocation2 + $0x330] sm:$0xff]
    %v147 = vld [vmem:[#allocation2 + $0x338] sm:$0xff]
    %v148 = vld [vmem:[#allocation2 + $0x340] sm:$0xff]
    %v149 = vld [vmem:[#allocation2 + $0x348] sm:$0xff]
    %v150 = vld [vmem:[#allocation2 + $0x350] sm:$0xff]
    %v151 = vld [vmem:[#allocation2 + $0x358] sm:$0xff]
    %v152 = vld [vmem:[#allocation2 + $0x360] sm:$0xff]
    %v153 = vld [vmem:[#allocation2 + $0x368] sm:$0xff]
    %v154 = vld [vmem:[#allocation2 + $0x370] sm:$0xff]
    %v155 = vld [vmem:[#allocation2 + $0x378] sm:$0xff]
    %v156 = vld [vmem:[#allocation2 + $0x380] sm:$0xff]
    %v157 = vld [vmem:[#allocation2 + $0x388] sm:$0xff]
    %v158 = vld [vmem:[#allocation2 + $0x390] sm:$0xff]
    %v159 = vld [vmem:[#allocation2 + $0x398] sm:$0xff]
    %v160 = vld [vmem:[#allocation2 + $0x3a0] sm:$0xff]
    %v161 = vld [vmem:[#allocation2 + $0x3a8] sm:$0xff]
    %v162 = vld [vmem:[#allocation2 + $0x3b0] sm:$0xff]
    %v163 = vld [vmem:[#allocation2 + $0x3b8] sm:$0xff]
    %v164 = vld [vmem:[#allocation2 + $0x3c0] sm:$0xff]
    %v165 = vld [vmem:[#allocation2 + $0x3c8] sm:$0xff]
    %v166 = vld [vmem:[#allocation2 + $0x3d0] sm:$0xff]
    %v167 = vld [vmem:[#allocation2 + $0x3d8] sm:$0xff]
    %v168 = vld [vmem:[#allocation2 + $0x3e0] sm:$0xff]
    %v169 = vld [vmem:[#allocation2 + $0x3e8] sm:$0xff]
    %v170 = vld [vmem:[#allocation2 + $0x3f0] sm:$0xff]
    %v171 = vld [vmem:[#allocation2 + $0x3f8] sm:$0xff]
    %v172 = vld [vmem:[%s2] sm:$0xf]
    %v174 = vlaneseq
    %v175 = vshrl.u32 %v174, 7
    %v176 = vsub.s32 0, %v175
    %v177 = vrot.slane %v172, %v176
    %v178 = vlaneseq
    %v179 = vshrl.u32 %v178, 7
    %v180 = vsub.s32 1, %v179
    %v181 = vrot.slane %v172, %v180
    %v182 = vlaneseq
    %v183 = vshrl.u32 %v182, 7
    %v184 = vsub.s32 2, %v183
    %v185 = vrot.slane %v172, %v184
    %v186 = vlaneseq
    %v187 = vshrl.u32 %v186, 7
    %v188 = vsub.s32 3, %v187
    %v189 = vrot.slane %v172, %v188
    %v202 = vcombine.low %v36, %v37
    %v203 = vcombine.low %v38, %v39
    %v204 = vcombine.low %v40, %v41
    %v205 = vcombine.low %v42, %v43
    %v207 = vunpack.c.l.s4 1966171168
    %v208 = vunpack.c.0.s8 %v207
    %v209 = vlaneseq
    %v210 = vshrl.u32 %v209, 7
    %v211 = vsub.s32 %v208, %v210
    %v212 = vrot.slane %v202, %v211
    %v214 = vunpack.c.l.s4 1966171168
    %v215 = vunpack.c.0.s8 %v214
    %v216 = vlaneseq
    %v217 = vshrl.u32 %v216, 7
    %v218 = vsub.s32 %v215, %v217
    %v219 = vrot.slane %v203, %v218
    %v221 = vunpack.c.l.s4 1966171168
    %v222 = vunpack.c.0.s8 %v221
    %v223 = vlaneseq
    %v224 = vshrl.u32 %v223, 7
    %v225 = vsub.s32 %v222, %v224
    %v226 = vrot.slane %v204, %v225
    %v228 = vunpack.c.l.s4 1966171168
    %v229 = vunpack.c.0.s8 %v228
    %v230 = vlaneseq
    %v231 = vshrl.u32 %v230, 7
    %v232 = vsub.s32 %v229, %v231
    %v233 = vrot.slane %v205, %v232
    %v234 = vcombine.low %v212, %v219
    %v235 = vcombine.high %v212, %v219
    %v236 = vcombine.low %v226, %v233
    %v237 = vcombine.high %v226, %v233
    %v239 = vunpack.c.l.s4 1966171168
    %v240 = vunpack.c.0.s8 %v239
    %v241 = vlaneseq
    %v242 = vshrl.u32 %v241, 7
    %v243 = vsub.s32 %v240, %v242
    %v244 = vrot.slane %v234, %v243
    %v246 = vunpack.c.l.s4 1966171168
    %v247 = vunpack.c.0.s8 %v246
    %v248 = vlaneseq
    %v249 = vshrl.u32 %v248, 7
    %v250 = vsub.s32 %v247, %v249
    %v251 = vrot.slane %v235, %v250
    %v253 = vunpack.c.l.s4 1966171168
    %v254 = vunpack.c.0.s8 %v253
    %v255 = vlaneseq
    %v256 = vshrl.u32 %v255, 7
    %v257 = vsub.s32 %v254, %v256
    %v258 = vrot.slane %v236, %v257
    %v260 = vunpack.c.l.s4 1966171168
    %v261 = vunpack.c.0.s8 %v260
    %v262 = vlaneseq
    %v263 = vshrl.u32 %v262, 7
    %v264 = vsub.s32 %v261, %v263
    %v265 = vrot.slane %v237, %v264
    %v266 = vcombine.low %v244, %v258
    %v267 = vcombine.high %v244, %v258
    %v268 = vcombine.low %v251, %v265
    %v269 = vcombine.high %v251, %v265
    %v402 = vunpack.c.l.b16 %v44
    %v403 = vunpack.c.h.b16 %v44
    %v404 = vunpack.c.l.b16 %v45
    %v405 = vunpack.c.h.b16 %v45
    %v406 = vunpack.c.l.b16 %v46
    %v407 = vunpack.c.h.b16 %v46
    %v408 = vunpack.c.l.b16 %v47
    %v409 = vunpack.c.h.b16 %v47
    %v410 = vunpack.c.l.b16 %v48
    %v411 = vunpack.c.h.b16 %v48
    %v412 = vunpack.c.l.b16 %v49
    %v413 = vunpack.c.h.b16 %v49
    %v414 = vunpack.c.l.b16 %v50
    %v415 = vunpack.c.h.b16 %v50
    %v416 = vunpack.c.l.b16 %v51
    %v417 = vunpack.c.h.b16 %v51
    %v418 = vunpack.c.l.b16 %v52
    %v419 = vunpack.c.h.b16 %v52
    %v420 = vunpack.c.l.b16 %v53
    %v421 = vunpack.c.h.b16 %v53
    %v422 = vunpack.c.l.b16 %v54
    %v423 = vunpack.c.h.b16 %v54
    %v424 = vunpack.c.l.b16 %v55
    %v425 = vunpack.c.h.b16 %v55
    %v426 = vunpack.c.l.b16 %v56
    %v427 = vunpack.c.h.b16 %v56
    %v428 = vunpack.c.l.b16 %v57
    %v429 = vunpack.c.h.b16 %v57
    %v430 = vunpack.c.l.b16 %v58
    %v431 = vunpack.c.h.b16 %v58
    %v432 = vunpack.c.l.b16 %v59
    %v433 = vunpack.c.h.b16 %v59
    %v434 = vunpack.c.l.b16 %v60
    %v435 = vunpack.c.h.b16 %v60
    %v436 = vunpack.c.l.b16 %v61
    %v437 = vunpack.c.h.b16 %v61
    %v438 = vunpack.c.l.b16 %v62
    %v439 = vunpack.c.h.b16 %v62
    %v440 = vunpack.c.l.b16 %v63
    %v441 = vunpack.c.h.b16 %v63
    %v442 = vunpack.c.l.b16 %v64
    %v443 = vunpack.c.h.b16 %v64
    %v444 = vunpack.c.l.b16 %v65
    %v445 = vunpack.c.h.b16 %v65
    %v446 = vunpack.c.l.b16 %v66
    %v447 = vunpack.c.h.b16 %v66
    %v448 = vunpack.c.l.b16 %v67
    %v449 = vunpack.c.h.b16 %v67
    %v450 = vunpack.c.l.b16 %v68
    %v451 = vunpack.c.h.b16 %v68
    %v452 = vunpack.c.l.b16 %v69
    %v453 = vunpack.c.h.b16 %v69
    %v454 = vunpack.c.l.b16 %v70
    %v455 = vunpack.c.h.b16 %v70
    %v456 = vunpack.c.l.b16 %v71
    %v457 = vunpack.c.h.b16 %v71
    %v458 = vunpack.c.l.b16 %v72
    %v459 = vunpack.c.h.b16 %v72
    %v460 = vunpack.c.l.b16 %v73
    %v461 = vunpack.c.h.b16 %v73
    %v462 = vunpack.c.l.b16 %v74
    %v463 = vunpack.c.h.b16 %v74
    %v464 = vunpack.c.l.b16 %v75
    %v465 = vunpack.c.h.b16 %v75
    %v466 = vunpack.c.l.b16 %v76
    %v467 = vunpack.c.h.b16 %v76
    %v468 = vunpack.c.l.b16 %v77
    %v469 = vunpack.c.h.b16 %v77
    %v470 = vunpack.c.l.b16 %v78
    %v471 = vunpack.c.h.b16 %v78
    %v472 = vunpack.c.l.b16 %v79
    %v473 = vunpack.c.h.b16 %v79
    %v474 = vunpack.c.l.b16 %v80
    %v475 = vunpack.c.h.b16 %v80
    %v476 = vunpack.c.l.b16 %v81
    %v477 = vunpack.c.h.b16 %v81
    %v478 = vunpack.c.l.b16 %v82
    %v479 = vunpack.c.h.b16 %v82
    %v480 = vunpack.c.l.b16 %v83
    %v481 = vunpack.c.h.b16 %v83
    %v482 = vunpack.c.l.b16 %v84
    %v483 = vunpack.c.h.b16 %v84
    %v484 = vunpack.c.l.b16 %v85
    %v485 = vunpack.c.h.b16 %v85
    %v486 = vunpack.c.l.b16 %v86
    %v487 = vunpack.c.h.b16 %v86
    %v488 = vunpack.c.l.b16 %v87
    %v489 = vunpack.c.h.b16 %v87
    %v490 = vunpack.c.l.b16 %v88
    %v491 = vunpack.c.h.b16 %v88
    %v492 = vunpack.c.l.b16 %v89
    %v493 = vunpack.c.h.b16 %v89
    %v494 = vunpack.c.l.b16 %v90
    %v495 = vunpack.c.h.b16 %v90
    %v496 = vunpack.c.l.b16 %v91
    %v497 = vunpack.c.h.b16 %v91
    %v498 = vunpack.c.l.b16 %v92
    %v499 = vunpack.c.h.b16 %v92
    %v500 = vunpack.c.l.b16 %v93
    %v501 = vunpack.c.h.b16 %v93
    %v502 = vunpack.c.l.b16 %v94
    %v503 = vunpack.c.h.b16 %v94
    %v504 = vunpack.c.l.b16 %v95
    %v505 = vunpack.c.h.b16 %v95
    %v506 = vunpack.c.l.b16 %v96
    %v507 = vunpack.c.h.b16 %v96
    %v508 = vunpack.c.l.b16 %v97
    %v509 = vunpack.c.h.b16 %v97
    %v510 = vunpack.c.l.b16 %v98
    %v511 = vunpack.c.h.b16 %v98
    %v512 = vunpack.c.l.b16 %v99
    %v513 = vunpack.c.h.b16 %v99
    %v514 = vunpack.c.l.b16 %v100
    %v515 = vunpack.c.h.b16 %v100
    %v516 = vunpack.c.l.b16 %v101
    %v517 = vunpack.c.h.b16 %v101
    %v518 = vunpack.c.l.b16 %v102
    %v519 = vunpack.c.h.b16 %v102
    %v520 = vunpack.c.l.b16 %v103
    %v521 = vunpack.c.h.b16 %v103
    %v522 = vunpack.c.l.b16 %v104
    %v523 = vunpack.c.h.b16 %v104
    %v524 = vunpack.c.l.b16 %v105
    %v525 = vunpack.c.h.b16 %v105
    %v526 = vunpack.c.l.b16 %v106
    %v527 = vunpack.c.h.b16 %v106
    %v528 = vunpack.c.l.b16 %v107
    %v529 = vunpack.c.h.b16 %v107
    %v530 = vunpack.c.l.b16 %v108
    %v531 = vunpack.c.h.b16 %v108
    %v532 = vunpack.c.l.b16 %v109
    %v533 = vunpack.c.h.b16 %v109
    %v534 = vunpack.c.l.b16 %v110
    %v535 = vunpack.c.h.b16 %v110
    %v536 = vunpack.c.l.b16 %v111
    %v537 = vunpack.c.h.b16 %v111
    %v538 = vunpack.c.l.b16 %v112
    %v539 = vunpack.c.h.b16 %v112
    %v540 = vunpack.c.l.b16 %v113
    %v541 = vunpack.c.h.b16 %v113
    %v542 = vunpack.c.l.b16 %v114
    %v543 = vunpack.c.h.b16 %v114
    %v544 = vunpack.c.l.b16 %v115
    %v545 = vunpack.c.h.b16 %v115
    %v546 = vunpack.c.l.b16 %v116
    %v547 = vunpack.c.h.b16 %v116
    %v548 = vunpack.c.l.b16 %v117
    %v549 = vunpack.c.h.b16 %v117
    %v550 = vunpack.c.l.b16 %v118
    %v551 = vunpack.c.h.b16 %v118
    %v552 = vunpack.c.l.b16 %v119
    %v553 = vunpack.c.h.b16 %v119
    %v554 = vunpack.c.l.b16 %v120
    %v555 = vunpack.c.h.b16 %v120
    %v556 = vunpack.c.l.b16 %v121
    %v557 = vunpack.c.h.b16 %v121
    %v558 = vunpack.c.l.b16 %v122
    %v559 = vunpack.c.h.b16 %v122
    %v560 = vunpack.c.l.b16 %v123
    %v561 = vunpack.c.h.b16 %v123
    %v562 = vunpack.c.l.b16 %v124
    %v563 = vunpack.c.h.b16 %v124
    %v564 = vunpack.c.l.b16 %v125
    %v565 = vunpack.c.h.b16 %v125
    %v566 = vunpack.c.l.b16 %v126
    %v567 = vunpack.c.h.b16 %v126
    %v568 = vunpack.c.l.b16 %v127
    %v569 = vunpack.c.h.b16 %v127
    %v570 = vunpack.c.l.b16 %v128
    %v571 = vunpack.c.h.b16 %v128
    %v572 = vunpack.c.l.b16 %v129
    %v573 = vunpack.c.h.b16 %v129
    %v574 = vunpack.c.l.b16 %v130
    %v575 = vunpack.c.h.b16 %v130
    %v576 = vunpack.c.l.b16 %v131
    %v577 = vunpack.c.h.b16 %v131
    %v578 = vunpack.c.l.b16 %v132
    %v579 = vunpack.c.h.b16 %v132
    %v580 = vunpack.c.l.b16 %v133
    %v581 = vunpack.c.h.b16 %v133
    %v582 = vunpack.c.l.b16 %v134
    %v583 = vunpack.c.h.b16 %v134
    %v584 = vunpack.c.l.b16 %v135
    %v585 = vunpack.c.h.b16 %v135
    %v586 = vunpack.c.l.b16 %v136
    %v587 = vunpack.c.h.b16 %v136
    %v588 = vunpack.c.l.b16 %v137
    %v589 = vunpack.c.h.b16 %v137
    %v590 = vunpack.c.l.b16 %v138
    %v591 = vunpack.c.h.b16 %v138
    %v592 = vunpack.c.l.b16 %v139
    %v593 = vunpack.c.h.b16 %v139
    %v594 = vunpack.c.l.b16 %v140
    %v595 = vunpack.c.h.b16 %v140
    %v596 = vunpack.c.l.b16 %v141
    %v597 = vunpack.c.h.b16 %v141
    %v598 = vunpack.c.l.b16 %v142
    %v599 = vunpack.c.h.b16 %v142
    %v600 = vunpack.c.l.b16 %v143
    %v601 = vunpack.c.h.b16 %v143
    %v602 = vunpack.c.l.b16 %v144
    %v603 = vunpack.c.h.b16 %v144
    %v604 = vunpack.c.l.b16 %v145
    %v605 = vunpack.c.h.b16 %v145
    %v606 = vunpack.c.l.b16 %v146
    %v607 = vunpack.c.h.b16 %v146
    %v608 = vunpack.c.l.b16 %v147
    %v609 = vunpack.c.h.b16 %v147
    %v610 = vunpack.c.l.b16 %v148
    %v611 = vunpack.c.h.b16 %v148
    %v612 = vunpack.c.l.b16 %v149
    %v613 = vunpack.c.h.b16 %v149
    %v614 = vunpack.c.l.b16 %v150
    %v615 = vunpack.c.h.b16 %v150
    %v616 = vunpack.c.l.b16 %v151
    %v617 = vunpack.c.h.b16 %v151
    %v618 = vunpack.c.l.b16 %v152
    %v619 = vunpack.c.h.b16 %v152
    %v620 = vunpack.c.l.b16 %v153
    %v621 = vunpack.c.h.b16 %v153
    %v622 = vunpack.c.l.b16 %v154
    %v623 = vunpack.c.h.b16 %v154
    %v624 = vunpack.c.l.b16 %v155
    %v625 = vunpack.c.h.b16 %v155
    %v626 = vunpack.c.l.b16 %v156
    %v627 = vunpack.c.h.b16 %v156
    %v628 = vunpack.c.l.b16 %v157
    %v629 = vunpack.c.h.b16 %v157
    %v630 = vunpack.c.l.b16 %v158
    %v631 = vunpack.c.h.b16 %v158
    %v632 = vunpack.c.l.b16 %v159
    %v633 = vunpack.c.h.b16 %v159
    %v634 = vunpack.c.l.b16 %v160
    %v635 = vunpack.c.h.b16 %v160
    %v636 = vunpack.c.l.b16 %v161
    %v637 = vunpack.c.h.b16 %v161
    %v638 = vunpack.c.l.b16 %v162
    %v639 = vunpack.c.h.b16 %v162
    %v640 = vunpack.c.l.b16 %v163
    %v641 = vunpack.c.h.b16 %v163
    %v642 = vunpack.c.l.b16 %v164
    %v643 = vunpack.c.h.b16 %v164
    %v644 = vunpack.c.l.b16 %v165
    %v645 = vunpack.c.h.b16 %v165
    %v646 = vunpack.c.l.b16 %v166
    %v647 = vunpack.c.h.b16 %v166
    %v648 = vunpack.c.l.b16 %v167
    %v649 = vunpack.c.h.b16 %v167
    %v650 = vunpack.c.l.b16 %v168
    %v651 = vunpack.c.h.b16 %v168
    %v652 = vunpack.c.l.b16 %v169
    %v653 = vunpack.c.h.b16 %v169
    %v654 = vunpack.c.l.b16 %v170
    %v655 = vunpack.c.h.b16 %v170
    %v656 = vunpack.c.l.b16 %v171
    %v657 = vunpack.c.h.b16 %v171
    %v658 = vpack.c.b16 %v406, %v402
    %v659 = vpack.c.b16 %v407, %v403
    %v660 = vpack.c.b16 %v408, %v404
    %v661 = vpack.c.b16 %v409, %v405
    %v662 = vpack.c.b16 %v414, %v410
    %v663 = vpack.c.b16 %v415, %v411
    %v664 = vpack.c.b16 %v416, %v412
    %v665 = vpack.c.b16 %v417, %v413
    %v666 = vpack.c.b16 %v422, %v418
    %v667 = vpack.c.b16 %v423, %v419
    %v668 = vpack.c.b16 %v424, %v420
    %v669 = vpack.c.b16 %v425, %v421
    %v670 = vpack.c.b16 %v430, %v426
    %v671 = vpack.c.b16 %v431, %v427
    %v672 = vpack.c.b16 %v432, %v428
    %v673 = vpack.c.b16 %v433, %v429
    %v674 = vpack.c.b16 %v438, %v434
    %v675 = vpack.c.b16 %v439, %v435
    %v676 = vpack.c.b16 %v440, %v436
    %v677 = vpack.c.b16 %v441, %v437
    %v678 = vpack.c.b16 %v446, %v442
    %v679 = vpack.c.b16 %v447, %v443
    %v680 = vpack.c.b16 %v448, %v444
    %v681 = vpack.c.b16 %v449, %v445
    %v682 = vpack.c.b16 %v454, %v450
    %v683 = vpack.c.b16 %v455, %v451
    %v684 = vpack.c.b16 %v456, %v452
    %v685 = vpack.c.b16 %v457, %v453
    %v686 = vpack.c.b16 %v462, %v458
    %v687 = vpack.c.b16 %v463, %v459
    %v688 = vpack.c.b16 %v464, %v460
    %v689 = vpack.c.b16 %v465, %v461
    %v690 = vpack.c.b16 %v470, %v466
    %v691 = vpack.c.b16 %v471, %v467
    %v692 = vpack.c.b16 %v472, %v468
    %v693 = vpack.c.b16 %v473, %v469
    %v694 = vpack.c.b16 %v478, %v474
    %v695 = vpack.c.b16 %v479, %v475
    %v696 = vpack.c.b16 %v480, %v476
    %v697 = vpack.c.b16 %v481, %v477
    %v698 = vpack.c.b16 %v486, %v482
    %v699 = vpack.c.b16 %v487, %v483
    %v700 = vpack.c.b16 %v488, %v484
    %v701 = vpack.c.b16 %v489, %v485
    %v702 = vpack.c.b16 %v494, %v490
    %v703 = vpack.c.b16 %v495, %v491
    %v704 = vpack.c.b16 %v496, %v492
    %v705 = vpack.c.b16 %v497, %v493
    %v706 = vpack.c.b16 %v502, %v498
    %v707 = vpack.c.b16 %v503, %v499
    %v708 = vpack.c.b16 %v504, %v500
    %v709 = vpack.c.b16 %v505, %v501
    %v710 = vpack.c.b16 %v510, %v506
    %v711 = vpack.c.b16 %v511, %v507
    %v712 = vpack.c.b16 %v512, %v508
    %v713 = vpack.c.b16 %v513, %v509
    %v714 = vpack.c.b16 %v518, %v514
    %v715 = vpack.c.b16 %v519, %v515
    %v716 = vpack.c.b16 %v520, %v516
    %v717 = vpack.c.b16 %v521, %v517
    %v718 = vpack.c.b16 %v526, %v522
    %v719 = vpack.c.b16 %v527, %v523
    %v720 = vpack.c.b16 %v528, %v524
    %v721 = vpack.c.b16 %v529, %v525
    %v722 = vpack.c.b16 %v534, %v530
    %v723 = vpack.c.b16 %v535, %v531
    %v724 = vpack.c.b16 %v536, %v532
    %v725 = vpack.c.b16 %v537, %v533
    %v726 = vpack.c.b16 %v542, %v538
    %v727 = vpack.c.b16 %v543, %v539
    %v728 = vpack.c.b16 %v544, %v540
    %v729 = vpack.c.b16 %v545, %v541
    %v730 = vpack.c.b16 %v550, %v546
    %v731 = vpack.c.b16 %v551, %v547
    %v732 = vpack.c.b16 %v552, %v548
    %v733 = vpack.c.b16 %v553, %v549
    %v734 = vpack.c.b16 %v558, %v554
    %v735 = vpack.c.b16 %v559, %v555
    %v736 = vpack.c.b16 %v560, %v556
    %v737 = vpack.c.b16 %v561, %v557
    %v738 = vpack.c.b16 %v566, %v562
    %v739 = vpack.c.b16 %v567, %v563
    %v740 = vpack.c.b16 %v568, %v564
    %v741 = vpack.c.b16 %v569, %v565
    %v742 = vpack.c.b16 %v574, %v570
    %v743 = vpack.c.b16 %v575, %v571
    %v744 = vpack.c.b16 %v576, %v572
    %v745 = vpack.c.b16 %v577, %v573
    %v746 = vpack.c.b16 %v582, %v578
    %v747 = vpack.c.b16 %v583, %v579
    %v748 = vpack.c.b16 %v584, %v580
    %v749 = vpack.c.b16 %v585, %v581
    %v750 = vpack.c.b16 %v590, %v586
    %v751 = vpack.c.b16 %v591, %v587
    %v752 = vpack.c.b16 %v592, %v588
    %v753 = vpack.c.b16 %v593, %v589
    %v754 = vpack.c.b16 %v598, %v594
    %v755 = vpack.c.b16 %v599, %v595
    %v756 = vpack.c.b16 %v600, %v596
    %v757 = vpack.c.b16 %v601, %v597
    %v758 = vpack.c.b16 %v606, %v602
    %v759 = vpack.c.b16 %v607, %v603
    %v760 = vpack.c.b16 %v608, %v604
    %v761 = vpack.c.b16 %v609, %v605
    %v762 = vpack.c.b16 %v614, %v610
    %v763 = vpack.c.b16 %v615, %v611
    %v764 = vpack.c.b16 %v616, %v612
    %v765 = vpack.c.b16 %v617, %v613
    %v766 = vpack.c.b16 %v622, %v618
    %v767 = vpack.c.b16 %v623, %v619
    %v768 = vpack.c.b16 %v624, %v620
    %v769 = vpack.c.b16 %v625, %v621
    %v770 = vpack.c.b16 %v630, %v626
    %v771 = vpack.c.b16 %v631, %v627
    %v772 = vpack.c.b16 %v632, %v628
    %v773 = vpack.c.b16 %v633, %v629
    %v774 = vpack.c.b16 %v638, %v634
    %v775 = vpack.c.b16 %v639, %v635
    %v776 = vpack.c.b16 %v640, %v636
    %v777 = vpack.c.b16 %v641, %v637
    %v778 = vpack.c.b16 %v646, %v642
    %v779 = vpack.c.b16 %v647, %v643
    %v780 = vpack.c.b16 %v648, %v644
    %v781 = vpack.c.b16 %v649, %v645
    %v782 = vpack.c.b16 %v654, %v650
    %v783 = vpack.c.b16 %v655, %v651
    %v784 = vpack.c.b16 %v656, %v652
    %v785 = vpack.c.b16 %v657, %v653
    %914 = vmatprep.subr.bf16.mxu0 %v687
    %915 = vmatpush1.bf16.msra.mxu0 %v686
    %916 = vmatprep.subr.bf16.mxu0 %v683
    %917 = vmatpush1.bf16.msra.mxu0 %v682
    %918 = vmatprep.subr.bf16.mxu0 %v679
    %919 = vmatpush1.bf16.msra.mxu0 %v678
    %920 = vmatprep.subr.bf16.mxu0 %v675
    %921 = vmatpush1.bf16.msra.mxu0 %v674
    %922 = vmatprep.subr.bf16.mxu0 %v671
    %923 = vmatpush1.bf16.msra.mxu0 %v670
    %924 = vmatprep.subr.bf16.mxu0 %v667
    %925 = vmatpush1.bf16.msra.mxu0 %v666
    %926 = vmatprep.subr.bf16.mxu0 %v663
    %927 = vmatpush1.bf16.msra.mxu0 %v662
    %928 = vmatprep.subr.bf16.mxu0 %v659
    %929 = vmatpush1.bf16.msra.mxu0 %v658
    %930 = vmatprep.subr.bf16.mxu0 %v719
    %931 = vmatpush2.bf16.msra.mxu0 %v718
    %932 = vmatprep.subr.bf16.mxu0 %v715
    %933 = vmatpush2.bf16.msra.mxu0 %v714
    %934 = vmatprep.subr.bf16.mxu0 %v711
    %935 = vmatpush2.bf16.msra.mxu0 %v710
    %936 = vmatprep.subr.bf16.mxu0 %v707
    %937 = vmatpush2.bf16.msra.mxu0 %v706
    %938 = vmatprep.subr.bf16.mxu0 %v703
    %939 = vmatpush2.bf16.msra.mxu0 %v702
    %940 = vmatprep.subr.bf16.mxu0 %v699
    %941 = vmatpush2.bf16.msra.mxu0 %v698
    %942 = vmatprep.subr.bf16.mxu0 %v695
    %943 = vmatpush2.bf16.msra.mxu0 %v694
    %944 = vmatprep.subr.bf16.mxu0 %v691
    %945 = vmatpush2.bf16.msra.mxu0 %v690
    %946 = vmatprep.mubr.bf16.mxu0 %v268
    %947 = vmatmul.mubr.bf16.gmra.mxu0 %v266
    %v948 = vpop.f32.mrf.mxu0
    %v949 = vadd.f32 %v177, %v948
    %v950 = vpop.f32.mrf.mxu0
    %v951 = vadd.f32 %v181, %v950
    %v952 = vpop.f32.mrf.mxu0
    %v953 = vadd.f32 %v177, %v952
    %v954 = vpop.f32.mrf.mxu0
    %v955 = vadd.f32 %v181, %v954
    %956 = vdwg.mxu0
    %957 = vmatprep.subr.bf16.mxu0 %v751
    %958 = vmatpush1.bf16.msra.mxu0 %v750
    %959 = vmatprep.subr.bf16.mxu0 %v747
    %960 = vmatpush1.bf16.msra.mxu0 %v746
    %961 = vmatprep.subr.bf16.mxu0 %v743
    %962 = vmatpush1.bf16.msra.mxu0 %v742
    %963 = vmatprep.subr.bf16.mxu0 %v739
    %964 = vmatpush1.bf16.msra.mxu0 %v738
    %965 = vmatprep.subr.bf16.mxu0 %v735
    %966 = vmatpush1.bf16.msra.mxu0 %v734
    %967 = vmatprep.subr.bf16.mxu0 %v731
    %968 = vmatpush1.bf16.msra.mxu0 %v730
    %969 = vmatprep.subr.bf16.mxu0 %v727
    %970 = vmatpush1.bf16.msra.mxu0 %v726
    %971 = vmatprep.subr.bf16.mxu0 %v723
    %972 = vmatpush1.bf16.msra.mxu0 %v722
    %973 = vmatprep.subr.bf16.mxu0 %v783
    %974 = vmatpush2.bf16.msra.mxu0 %v782
    %975 = vmatprep.subr.bf16.mxu0 %v779
    %976 = vmatpush2.bf16.msra.mxu0 %v778
    %977 = vmatprep.subr.bf16.mxu0 %v775
    %978 = vmatpush2.bf16.msra.mxu0 %v774
    %979 = vmatprep.subr.bf16.mxu0 %v771
    %980 = vmatpush2.bf16.msra.mxu0 %v770
    %981 = vmatprep.subr.bf16.mxu0 %v767
    %982 = vmatpush2.bf16.msra.mxu0 %v766
    %983 = vmatprep.subr.bf16.mxu0 %v763
    %984 = vmatpush2.bf16.msra.mxu0 %v762
    %985 = vmatprep.subr.bf16.mxu0 %v759
    %986 = vmatpush2.bf16.msra.mxu0 %v758
    %987 = vmatprep.subr.bf16.mxu0 %v755
    %988 = vmatpush2.bf16.msra.mxu0 %v754
    %989 = vmatprep.mubr.bf16.mxu0 %v269
    %990 = vmatmul.mubr.bf16.gmra.mxu0 %v267
    %v991 = vpop.f32.mrf.mxu0
    %v992 = vadd.f32 %v949, %v991
    %v993 = vpop.f32.mrf.mxu0
    %v994 = vadd.f32 %v951, %v993
    %v995 = vpop.f32.mrf.mxu0
    %v996 = vadd.f32 %v953, %v995
    %v997 = vpop.f32.mrf.mxu0
    %v998 = vadd.f32 %v955, %v997
    %999 = vdwg.mxu0
    %1000 = vmatprep.subr.bf16.mxu0 %v689
    %1001 = vmatpush1.bf16.msra.mxu0 %v688
    %1002 = vmatprep.subr.bf16.mxu0 %v685
    %1003 = vmatpush1.bf16.msra.mxu0 %v684
    %1004 = vmatprep.subr.bf16.mxu0 %v681
    %1005 = vmatpush1.bf16.msra.mxu0 %v680
    %1006 = vmatprep.subr.bf16.mxu0 %v677
    %1007 = vmatpush1.bf16.msra.mxu0 %v676
    %1008 = vmatprep.subr.bf16.mxu0 %v673
    %1009 = vmatpush1.bf16.msra.mxu0 %v672
    %1010 = vmatprep.subr.bf16.mxu0 %v669
    %1011 = vmatpush1.bf16.msra.mxu0 %v668
    %1012 = vmatprep.subr.bf16.mxu0 %v665
    %1013 = vmatpush1.bf16.msra.mxu0 %v664
    %1014 = vmatprep.subr.bf16.mxu0 %v661
    %1015 = vmatpush1.bf16.msra.mxu0 %v660
    %1016 = vmatprep.subr.bf16.mxu0 %v721
    %1017 = vmatpush2.bf16.msra.mxu0 %v720
    %1018 = vmatprep.subr.bf16.mxu0 %v717
    %1019 = vmatpush2.bf16.msra.mxu0 %v716
    %1020 = vmatprep.subr.bf16.mxu0 %v713
    %1021 = vmatpush2.bf16.msra.mxu0 %v712
    %1022 = vmatprep.subr.bf16.mxu0 %v709
    %1023 = vmatpush2.bf16.msra.mxu0 %v708
    %1024 = vmatprep.subr.bf16.mxu0 %v705
    %1025 = vmatpush2.bf16.msra.mxu0 %v704
    %1026 = vmatprep.subr.bf16.mxu0 %v701
    %1027 = vmatpush2.bf16.msra.mxu0 %v700
    %1028 = vmatprep.subr.bf16.mxu0 %v697
    %1029 = vmatpush2.bf16.msra.mxu0 %v696
    %1030 = vmatprep.subr.bf16.mxu0 %v693
    %1031 = vmatpush2.bf16.msra.mxu0 %v692
    %1032 = vmatprep.mubr.bf16.mxu0 %v268
    %1033 = vmatmul.mubr.bf16.gmra.mxu0 %v266
    %v1034 = vpop.f32.mrf.mxu0
    %v1035 = vadd.f32 %v185, %v1034
    %v1036 = vpop.f32.mrf.mxu0
    %v1037 = vadd.f32 %v189, %v1036
    %v1038 = vpop.f32.mrf.mxu0
    %v1039 = vadd.f32 %v185, %v1038
    %v1040 = vpop.f32.mrf.mxu0
    %v1041 = vadd.f32 %v189, %v1040
    %1042 = vdwg.mxu0
    %1043 = vmatprep.subr.bf16.mxu0 %v753
    %1044 = vmatpush1.bf16.msra.mxu0 %v752
    %1045 = vmatprep.subr.bf16.mxu0 %v749
    %1046 = vmatpush1.bf16.msra.mxu0 %v748
    %1047 = vmatprep.subr.bf16.mxu0 %v745
    %1048 = vmatpush1.bf16.msra.mxu0 %v744
    %1049 = vmatprep.subr.bf16.mxu0 %v741
    %1050 = vmatpush1.bf16.msra.mxu0 %v740
    %1051 = vmatprep.subr.bf16.mxu0 %v737
    %1052 = vmatpush1.bf16.msra.mxu0 %v736
    %1053 = vmatprep.subr.bf16.mxu0 %v733
    %1054 = vmatpush1.bf16.msra.mxu0 %v732
    %1055 = vmatprep.subr.bf16.mxu0 %v729
    %1056 = vmatpush1.bf16.msra.mxu0 %v728
    %1057 = vmatprep.subr.bf16.mxu0 %v725
    %1058 = vmatpush1.bf16.msra.mxu0 %v724
    %1059 = vmatprep.subr.bf16.mxu0 %v785
    %1060 = vmatpush2.bf16.msra.mxu0 %v784
    %1061 = vmatprep.subr.bf16.mxu0 %v781
    %1062 = vmatpush2.bf16.msra.mxu0 %v780
    %1063 = vmatprep.subr.bf16.mxu0 %v777
    %1064 = vmatpush2.bf16.msra.mxu0 %v776
    %1065 = vmatprep.subr.bf16.mxu0 %v773
    %1066 = vmatpush2.bf16.msra.mxu0 %v772
    %1067 = vmatprep.subr.bf16.mxu0 %v769
    %1068 = vmatpush2.bf16.msra.mxu0 %v768
    %1069 = vmatprep.subr.bf16.mxu0 %v765
    %1070 = vmatpush2.bf16.msra.mxu0 %v764
    %1071 = vmatprep.subr.bf16.mxu0 %v761
    %1072 = vmatpush2.bf16.msra.mxu0 %v760
    %1073 = vmatprep.subr.bf16.mxu0 %v757
    %1074 = vmatpush2.bf16.msra.mxu0 %v756
    %1075 = vmatprep.mubr.bf16.mxu0 %v269
    %1076 = vmatmul.mubr.bf16.gmra.mxu0 %v267
    %v1077 = vpop.f32.mrf.mxu0
    %v1078 = vadd.f32 %v1035, %v1077
    %v1079 = vpop.f32.mrf.mxu0
    %v1080 = vadd.f32 %v1037, %v1079
    %v1081 = vpop.f32.mrf.mxu0
    %v1082 = vadd.f32 %v1039, %v1081
    %v1083 = vpop.f32.mrf.mxu0
    %v1084 = vadd.f32 %v1041, %v1083
    %1085 = vdwg.mxu0
    %v1086 = vmax.f32 %v992, 0.0
    %v1087 = vmax.f32 %v994, 0.0
    %v1088 = vmax.f32 %v1078, 0.0
    %v1089 = vmax.f32 %v1080, 0.0
    %v1090 = vmax.f32 %v996, 0.0
    %v1091 = vmax.f32 %v998, 0.0
    %v1092 = vmax.f32 %v1082, 0.0
    %v1093 = vmax.f32 %v1084, 0.0
    %v1094 = vpack.c.bf16 %v1090, %v1086
    %v1095 = vpack.c.bf16 %v1091, %v1087
    %v1096 = vpack.c.bf16 %v1092, %v1088
    %v1097 = vpack.c.bf16 %v1093, %v1089
    %v1098 = vld [vmem:[%s3] sm:$0xf]
    %v1099 = vld [vmem:[%s3 + $0x4] sm:$0xf]
    %v1100 = vld [vmem:[%s3 + $0x8] sm:$0xf]
    %v1101 = vld [vmem:[%s3 + $0xc] sm:$0xf]
    %v1102 = vld [vmem:[%s3 + $0x10] sm:$0xf]
    %v1103 = vld [vmem:[%s3 + $0x14] sm:$0xf]
    %v1104 = vld [vmem:[%s3 + $0x18] sm:$0xf]
    %v1105 = vld [vmem:[%s3 + $0x1c] sm:$0xf]
    %v1106 = vld [vmem:[%s3 + $0x20] sm:$0xf]
    %v1107 = vld [vmem:[%s3 + $0x24] sm:$0xf]
    %v1108 = vld [vmem:[%s3 + $0x28] sm:$0xf]
    %v1109 = vld [vmem:[%s3 + $0x2c] sm:$0xf]
    %v1110 = vld [vmem:[%s3 + $0x30] sm:$0xf]
    %v1111 = vld [vmem:[%s3 + $0x34] sm:$0xf]
    %v1112 = vld [vmem:[%s3 + $0x38] sm:$0xf]
    %v1113 = vld [vmem:[%s3 + $0x3c] sm:$0xf]
    %v1114 = vld [vmem:[%s3 + $0x40] sm:$0xf]
    %v1115 = vld [vmem:[%s3 + $0x44] sm:$0xf]
    %v1116 = vld [vmem:[%s3 + $0x48] sm:$0xf]
    %v1117 = vld [vmem:[%s3 + $0x4c] sm:$0xf]
    %v1118 = vld [vmem:[%s3 + $0x50] sm:$0xf]
    %v1119 = vld [vmem:[%s3 + $0x54] sm:$0xf]
    %v1120 = vld [vmem:[%s3 + $0x58] sm:$0xf]
    %v1121 = vld [vmem:[%s3 + $0x5c] sm:$0xf]
    %v1122 = vld [vmem:[%s3 + $0x60] sm:$0xf]
    %v1123 = vld [vmem:[%s3 + $0x64] sm:$0xf]
    %v1124 = vld [vmem:[%s3 + $0x68] sm:$0xf]
    %v1125 = vld [vmem:[%s3 + $0x6c] sm:$0xf]
    %v1126 = vld [vmem:[%s3 + $0x70] sm:$0xf]
    %v1127 = vld [vmem:[%s3 + $0x74] sm:$0xf]
    %v1128 = vld [vmem:[%s3 + $0x78] sm:$0xf]
    %v1129 = vld [vmem:[%s3 + $0x7c] sm:$0xf]
    %v1130 = vld [vmem:[%s3 + $0x80] sm:$0xf]
    %v1131 = vld [vmem:[%s3 + $0x84] sm:$0xf]
    %v1132 = vld [vmem:[%s3 + $0x88] sm:$0xf]
    %v1133 = vld [vmem:[%s3 + $0x8c] sm:$0xf]
    %v1134 = vld [vmem:[%s3 + $0x90] sm:$0xf]
    %v1135 = vld [vmem:[%s3 + $0x94] sm:$0xf]
    %v1136 = vld [vmem:[%s3 + $0x98] sm:$0xf]
    %v1137 = vld [vmem:[%s3 + $0x9c] sm:$0xf]
    %v1138 = vld [vmem:[%s3 + $0xa0] sm:$0xf]
    %v1139 = vld [vmem:[%s3 + $0xa4] sm:$0xf]
    %v1140 = vld [vmem:[%s3 + $0xa8] sm:$0xf]
    %v1141 = vld [vmem:[%s3 + $0xac] sm:$0xf]
    %v1142 = vld [vmem:[%s3 + $0xb0] sm:$0xf]
    %v1143 = vld [vmem:[%s3 + $0xb4] sm:$0xf]
    %v1144 = vld [vmem:[%s3 + $0xb8] sm:$0xf]
    %v1145 = vld [vmem:[%s3 + $0xbc] sm:$0xf]
    %v1146 = vld [vmem:[%s3 + $0xc0] sm:$0xf]
    %v1147 = vld [vmem:[%s3 + $0xc4] sm:$0xf]
    %v1148 = vld [vmem:[%s3 + $0xc8] sm:$0xf]
    %v1149 = vld [vmem:[%s3 + $0xcc] sm:$0xf]
    %v1150 = vld [vmem:[%s3 + $0xd0] sm:$0xf]
    %v1151 = vld [vmem:[%s3 + $0xd4] sm:$0xf]
    %v1152 = vld [vmem:[%s3 + $0xd8] sm:$0xf]
    %v1153 = vld [vmem:[%s3 + $0xdc] sm:$0xf]
    %v1154 = vld [vmem:[%s3 + $0xe0] sm:$0xf]
    %v1155 = vld [vmem:[%s3 + $0xe4] sm:$0xf]
    %v1156 = vld [vmem:[%s3 + $0xe8] sm:$0xf]
    %v1157 = vld [vmem:[%s3 + $0xec] sm:$0xf]
    %v1158 = vld [vmem:[%s3 + $0xf0] sm:$0xf]
    %v1159 = vld [vmem:[%s3 + $0xf4] sm:$0xf]
    %v1160 = vld [vmem:[%s3 + $0xf8] sm:$0xf]
    %v1161 = vld [vmem:[%s3 + $0xfc] sm:$0xf]
    %v1162 = vld [vmem:[%s4] sm:$0x1]
    %v1164 = vlaneseq
    %v1165 = vshrl.u32 %v1164, 7
    %v1166 = vsub.s32 0, %v1165
    %v1167 = vrot.slane %v1162, %v1166
    %v1233 = vunpack.c.l.b16 %v1098
    %v1234 = vunpack.c.l.b16 %v1099
    %v1235 = vunpack.c.l.b16 %v1100
    %v1236 = vunpack.c.l.b16 %v1101
    %v1237 = vunpack.c.l.b16 %v1102
    %v1238 = vunpack.c.l.b16 %v1103
    %v1239 = vunpack.c.l.b16 %v1104
    %v1240 = vunpack.c.l.b16 %v1105
    %v1241 = vunpack.c.l.b16 %v1106
    %v1242 = vunpack.c.l.b16 %v1107
    %v1243 = vunpack.c.l.b16 %v1108
    %v1244 = vunpack.c.l.b16 %v1109
    %v1245 = vunpack.c.l.b16 %v1110
    %v1246 = vunpack.c.l.b16 %v1111
    %v1247 = vunpack.c.l.b16 %v1112
    %v1248 = vunpack.c.l.b16 %v1113
    %v1249 = vunpack.c.l.b16 %v1114
    %v1250 = vunpack.c.l.b16 %v1115
    %v1251 = vunpack.c.l.b16 %v1116
    %v1252 = vunpack.c.l.b16 %v1117
    %v1253 = vunpack.c.l.b16 %v1118
    %v1254 = vunpack.c.l.b16 %v1119
    %v1255 = vunpack.c.l.b16 %v1120
    %v1256 = vunpack.c.l.b16 %v1121
    %v1257 = vunpack.c.l.b16 %v1122
    %v1258 = vunpack.c.l.b16 %v1123
    %v1259 = vunpack.c.l.b16 %v1124
    %v1260 = vunpack.c.l.b16 %v1125
    %v1261 = vunpack.c.l.b16 %v1126
    %v1262 = vunpack.c.l.b16 %v1127
    %v1263 = vunpack.c.l.b16 %v1128
    %v1264 = vunpack.c.l.b16 %v1129
    %v1265 = vunpack.c.l.b16 %v1130
    %v1266 = vunpack.c.l.b16 %v1131
    %v1267 = vunpack.c.l.b16 %v1132
    %v1268 = vunpack.c.l.b16 %v1133
    %v1269 = vunpack.c.l.b16 %v1134
    %v1270 = vunpack.c.l.b16 %v1135
    %v1271 = vunpack.c.l.b16 %v1136
    %v1272 = vunpack.c.l.b16 %v1137
    %v1273 = vunpack.c.l.b16 %v1138
    %v1274 = vunpack.c.l.b16 %v1139
    %v1275 = vunpack.c.l.b16 %v1140
    %v1276 = vunpack.c.l.b16 %v1141
    %v1277 = vunpack.c.l.b16 %v1142
    %v1278 = vunpack.c.l.b16 %v1143
    %v1279 = vunpack.c.l.b16 %v1144
    %v1280 = vunpack.c.l.b16 %v1145
    %v1281 = vunpack.c.l.b16 %v1146
    %v1282 = vunpack.c.l.b16 %v1147
    %v1283 = vunpack.c.l.b16 %v1148
    %v1284 = vunpack.c.l.b16 %v1149
    %v1285 = vunpack.c.l.b16 %v1150
    %v1286 = vunpack.c.l.b16 %v1151
    %v1287 = vunpack.c.l.b16 %v1152
    %v1288 = vunpack.c.l.b16 %v1153
    %v1289 = vunpack.c.l.b16 %v1154
    %v1290 = vunpack.c.l.b16 %v1155
    %v1291 = vunpack.c.l.b16 %v1156
    %v1292 = vunpack.c.l.b16 %v1157
    %v1293 = vunpack.c.l.b16 %v1158
    %v1294 = vunpack.c.l.b16 %v1159
    %v1295 = vunpack.c.l.b16 %v1160
    %v1296 = vunpack.c.l.b16 %v1161
    %v1297 = vpack.c.b16 %v1234, %v1233
    %v1298 = vpack.c.b16 %v1236, %v1235
    %v1299 = vpack.c.b16 %v1238, %v1237
    %v1300 = vpack.c.b16 %v1240, %v1239
    %v1301 = vpack.c.b16 %v1242, %v1241
    %v1302 = vpack.c.b16 %v1244, %v1243
    %v1303 = vpack.c.b16 %v1246, %v1245
    %v1304 = vpack.c.b16 %v1248, %v1247
    %v1305 = vpack.c.b16 %v1250, %v1249
    %v1306 = vpack.c.b16 %v1252, %v1251
    %v1307 = vpack.c.b16 %v1254, %v1253
    %v1308 = vpack.c.b16 %v1256, %v1255
    %v1309 = vpack.c.b16 %v1258, %v1257
    %v1310 = vpack.c.b16 %v1260, %v1259
    %v1311 = vpack.c.b16 %v1262, %v1261
    %v1312 = vpack.c.b16 %v1264, %v1263
    %v1313 = vpack.c.b16 %v1266, %v1265
    %v1314 = vpack.c.b16 %v1268, %v1267
    %v1315 = vpack.c.b16 %v1270, %v1269
    %v1316 = vpack.c.b16 %v1272, %v1271
    %v1317 = vpack.c.b16 %v1274, %v1273
    %v1318 = vpack.c.b16 %v1276, %v1275
    %v1319 = vpack.c.b16 %v1278, %v1277
    %v1320 = vpack.c.b16 %v1280, %v1279
    %v1321 = vpack.c.b16 %v1282, %v1281
    %v1322 = vpack.c.b16 %v1284, %v1283
    %v1323 = vpack.c.b16 %v1286, %v1285
    %v1324 = vpack.c.b16 %v1288, %v1287
    %v1325 = vpack.c.b16 %v1290, %v1289
    %v1326 = vpack.c.b16 %v1292, %v1291
    %v1327 = vpack.c.b16 %v1294, %v1293
    %v1328 = vpack.c.b16 %v1296, %v1295
    %1361 = vmatprep.subr.bf16.mxu0 0
    %1362 = vmatpush1.bf16.msra.mxu0 %v1304
    %1363 = vmatprep.subr.bf16.mxu0 0
    %1364 = vmatpush1.bf16.msra.mxu0 %v1303
    %1365 = vmatprep.subr.bf16.mxu0 0
    %1366 = vmatpush1.bf16.msra.mxu0 %v1302
    %1367 = vmatprep.subr.bf16.mxu0 0
    %1368 = vmatpush1.bf16.msra.mxu0 %v1301
    %1369 = vmatprep.subr.bf16.mxu0 0
    %1370 = vmatpush1.bf16.msra.mxu0 %v1300
    %1371 = vmatprep.subr.bf16.mxu0 0
    %1372 = vmatpush1.bf16.msra.mxu0 %v1299
    %1373 = vmatprep.subr.bf16.mxu0 0
    %1374 = vmatpush1.bf16.msra.mxu0 %v1298
    %1375 = vmatprep.subr.bf16.mxu0 0
    %1376 = vmatpush1.bf16.msra.mxu0 %v1297
    %1377 = vmatprep.subr.bf16.mxu0 0
    %1378 = vmatpush2.bf16.msra.mxu0 %v1312
    %1379 = vmatprep.subr.bf16.mxu0 0
    %1380 = vmatpush2.bf16.msra.mxu0 %v1311
    %1381 = vmatprep.subr.bf16.mxu0 0
    %1382 = vmatpush2.bf16.msra.mxu0 %v1310
    %1383 = vmatprep.subr.bf16.mxu0 0
    %1384 = vmatpush2.bf16.msra.mxu0 %v1309
    %1385 = vmatprep.subr.bf16.mxu0 0
    %1386 = vmatpush2.bf16.msra.mxu0 %v1308
    %1387 = vmatprep.subr.bf16.mxu0 0
    %1388 = vmatpush2.bf16.msra.mxu0 %v1307
    %1389 = vmatprep.subr.bf16.mxu0 0
    %1390 = vmatpush2.bf16.msra.mxu0 %v1306
    %1391 = vmatprep.subr.bf16.mxu0 0
    %1392 = vmatpush2.bf16.msra.mxu0 %v1305
    %1393 = vmatprep.mubr.bf16.mxu0 %v1095
    %1394 = vmatmul.mubr.bf16.gmra.mxu0 %v1094
    %v1395 = vpop.f32.mrf.mxu0
    %v1396 = vadd.f32 %v1167, %v1395
    %v1397 = vpop.f32.mrf.mxu0
    %v1398 = vpop.f32.mrf.mxu0
    %v1399 = vadd.f32 %v1167, %v1398
    %v1400 = vpop.f32.mrf.mxu0
    %1401 = vdwg.mxu0
    %1402 = vmatprep.subr.bf16.mxu0 0
    %1403 = vmatpush1.bf16.msra.mxu0 %v1320
    %1404 = vmatprep.subr.bf16.mxu0 0
    %1405 = vmatpush1.bf16.msra.mxu0 %v1319
    %1406 = vmatprep.subr.bf16.mxu0 0
    %1407 = vmatpush1.bf16.msra.mxu0 %v1318
    %1408 = vmatprep.subr.bf16.mxu0 0
    %1409 = vmatpush1.bf16.msra.mxu0 %v1317
    %1410 = vmatprep.subr.bf16.mxu0 0
    %1411 = vmatpush1.bf16.msra.mxu0 %v1316
    %1412 = vmatprep.subr.bf16.mxu0 0
    %1413 = vmatpush1.bf16.msra.mxu0 %v1315
    %1414 = vmatprep.subr.bf16.mxu0 0
    %1415 = vmatpush1.bf16.msra.mxu0 %v1314
    %1416 = vmatprep.subr.bf16.mxu0 0
    %1417 = vmatpush1.bf16.msra.mxu0 %v1313
    %1418 = vmatprep.subr.bf16.mxu0 0
    %1419 = vmatpush2.bf16.msra.mxu0 %v1328
    %1420 = vmatprep.subr.bf16.mxu0 0
    %1421 = vmatpush2.bf16.msra.mxu0 %v1327
    %1422 = vmatprep.subr.bf16.mxu0 0
    %1423 = vmatpush2.bf16.msra.mxu0 %v1326
    %1424 = vmatprep.subr.bf16.mxu0 0
    %1425 = vmatpush2.bf16.msra.mxu0 %v1325
    %1426 = vmatprep.subr.bf16.mxu0 0
    %1427 = vmatpush2.bf16.msra.mxu0 %v1324
    %1428 = vmatprep.subr.bf16.mxu0 0
    %1429 = vmatpush2.bf16.msra.mxu0 %v1323
    %1430 = vmatprep.subr.bf16.mxu0 0
    %1431 = vmatpush2.bf16.msra.mxu0 %v1322
    %1432 = vmatprep.subr.bf16.mxu0 0
    %1433 = vmatpush2.bf16.msra.mxu0 %v1321
    %1434 = vmatprep.mubr.bf16.mxu0 %v1097
    %1435 = vmatmul.mubr.bf16.gmra.mxu0 %v1096
    %v1436 = vpop.f32.mrf.mxu0
    %v1437 = vadd.f32 %v1396, %v1436
    %v1438 = vpop.f32.mrf.mxu0
    %v1439 = vpop.f32.mrf.mxu0
    %v1440 = vadd.f32 %v1399, %v1439
    %v1441 = vpop.f32.mrf.mxu0
    %1442 = vdwg.mxu0
    %vm1443 = vcmask 64512
    %1444 = vst.msk [vmem:[#allocation5] sm:$0xff] %vm1443, %v1437
    %1445 = vst.msk [vmem:[#allocation5 + $0x8] sm:$0xff] %vm1443, %v1440
    // Predicated region
    $region26: #{tpu_custom_call.1} parent=1 // pred_check
      _
    $region27: #{tpu_custom_call.1} parent=1 // pred_check_branch
      %1447 = sbr.rel (0) target = $region29
    $region28: #{tpu_custom_call.1} parent=1 // pred_region
      %s1449 = ssub.s32 256, 32
      %1450 = vsyncadd [#allocation4], %s1449
      %s1451 = sshll.u32 [#allocation5], 4
      %s1452 = int_to_ptr.vmem [resolvable:$true] %s1451
      %1457 = dma.vmem_to_hbm [thread:$0]  %s1452, 32, %s5, [#allocation4], 32, 32, 2
    $region29: #{tpu_custom_call.1} parent=1 // pred_fallthru
      _
    // Predicated region
    $region30: #{tpu_custom_call.1} parent=1 // pred_check
      _
    $region31: #{tpu_custom_call.1} parent=1 // pred_check_branch
      %1459 = sbr.rel (0) target = $region33
    $region32: #{tpu_custom_call.1} parent=1 // pred_region
      %1460 = dma.done [#allocation4], 256
    $region33: #{tpu_custom_call.1} parent=1 // pred_fallthru
      _
    %1461 = vsyncpa [#allocation3], 1
    %1462 = vsyncpa [#allocation4], 1

</llo_original>
